<compile_context>
chip_gen: v7x
topology: tpu7x:2x2x1
jax: 0.10.0
libtpu: 0.0.40
codegen_flags: <defaults>
</compile_context>

<pallas_src>
import jax
import jax.numpy as jnp
from jax.experimental import pallas as pl
from jax.experimental.pallas import tpu as pltpu

# self.w = c.w comes from a config object in the original code; fixed here.
GW_W = 4.0


def _round_up(x, m):
    return ((x + m - 1) // m) * m


def _vmem_capacity_bytes():
    """Physical VMEM of the current chip; conservative (v7x) fallback."""
    try:
        info = pltpu.get_tpu_info()
        for name in ("vmem_capacity_bytes", "vmem_bytes", "vmem_size_bytes"):
            v = getattr(info, name, None)
            if v:
                return int(v)
    except Exception:
        pass
    return 64 * 1024 * 1024


def _make_kernel(w_img, hw, w_val, tile_bc, chunk_rows, out_w, bc_total,
                 ragged, pow2_w):
    """Kernel over a (tile_bc, hw) slab of flattened images (lane-dense)."""
    num_chunks = tile_bc // chunk_rows
    fold = (hw % 128 == 0) and hw >= 128
    nfull = hw // 128 if fold else 0
    w_val = float(w_val)

    def _body(x1_ref, x2_ref, colw, out_ref):
        # ---- per-step constants, hoisted out of the chunk loop ----
        pos = jax.lax.broadcasted_iota(jnp.int32, (1, hw), 1)
        if pow2_w:
            col = pos & jnp.int32(w_img - 1)       # column-in-row, no modulo
        else:
            col = colw                              # precomputed (1, hw) i32
        m_has_r = jnp.broadcast_to(col != (w_img - 1), (chunk_rows, hw))  # j<W-1
        m_has_l = jnp.broadcast_to(col != 0, (chunk_rows, hw))            # j>0
        m_has_u = jnp.broadcast_to(pos >= w_img, (chunk_rows, hw))        # i>0
        m_has_d = jnp.broadcast_to(pos < (hw - w_img), (chunk_rows, hw))  # i<H-1

        def pull(x, k):
            # out[:, p] = x[:, (p + k) mod hw]; wrap removed by the masks.
            return pltpu.roll(x, shift=(-k) % hw, axis=1)

        def chunk_loss(x1c, x2c, rows_left):
            # Conv linearity: Sobel responses of d = x1 - x2 directly.
            d = x1c.astype(jnp.float32) - x2c.astype(jnp.float32)
            # Horizontal (+/-1 lane) pass first — only 2 arbitrary lane rolls.
            d_r = jnp.where(m_has_r, pull(d, 1), 0.0)     # d[i, j+1]
            d_l = jnp.where(m_has_l, pull(d, -1), 0.0)    # d[i, j-1]
            sw = d_l + 2.0 * d + d_r                      # [1,2,1] along W
            dw = d_r - d_l                                # [-1,0,1] along W
            # Vertical (+/-W lane) pass; multiple-of-128 shifts when W%128==0.
            dw_dn = jnp.where(m_has_u, pull(dw, -w_img), 0.0)   # dw[i-1, j]
            dw_up = jnp.where(m_has_d, pull(dw, w_img), 0.0)    # dw[i+1, j]
            sw_dn = jnp.where(m_has_u, pull(sw, -w_img), 0.0)
            sw_up = jnp.where(m_has_d, pull(sw, w_img), 0.0)
            ix = dw_dn + 2.0 * dw + dw_up                 # sobel_x * d (0-pad)
            iy = sw_up - sw_dn                            # sobel_y * d (0-pad)
            loss = (1.0 + w_val * jnp.abs(ix)) * (1.0 + w_val * jnp.abs(iy)) \
                   * jnp.abs(d)
            if rows_left is not None:
                # Ragged last block: rows past bc hold garbage — mask them out.
                sub = jax.lax.broadcasted_iota(jnp.int32, (chunk_rows, 1), 0)
                loss = jnp.where(sub < rows_left, loss, 0.0)
            # Lane fold to 128 wide (aligned 128-lane slices, VPU adds).
            if nfull > 0:
                lf = loss[:, 0:128]
                for g in range(1, nfull):
                    lf = lf + loss[:, g * 128:(g + 1) * 128]
            else:
                lf = loss                                  # hw < 128: out_w = hw
            # Sublane fold to 8 rows (aligned sublane slices).
            sf = lf[0:8, :]
            for g in range(1, chunk_rows // 8):
                sf = sf + lf[g * 8:(g + 1) * 8, :]
            return sf

        step = pl.program_id(0)
        base = step * tile_bc

        if num_chunks == 1:
            rows_left = (bc_total - base) if ragged else None
            out_ref[...] = chunk_loss(x1_ref[...], x2_ref[...], rows_left)
        else:
            def loop_body(ci, acc):
                r0 = pl.multiple_of(ci * chunk_rows, chunk_rows)
                x1c = x1_ref[pl.ds(r0, chunk_rows), :]
                x2c = x2_ref[pl.ds(r0, chunk_rows), :]
                rl = (bc_total - base - ci * chunk_rows) if ragged else None
                return acc + chunk_loss(x1c, x2c, rl)

            acc0 = jnp.zeros((8, out_w), jnp.float32)
            out_ref[...] = jax.lax.fori_loop(
                0, num_chunks, loop_body, acc0, unroll=(num_chunks <= 4))

    if pow2_w:
        def kernel(x1_ref, x2_ref, out_ref):
            _body(x1_ref, x2_ref, None, out_ref)
    else:
        def kernel(x1_ref, x2_ref, colw_ref, out_ref):
            _body(x1_ref, x2_ref, colw_ref[...], out_ref)

    return kernel


def gw_loss(x1, x2, w=GW_W, reduction="mean"):
    assert x1.shape == x2.shape and x1.ndim == 4
    b, c, h, wd = x1.shape
    hw = h * wd
    bc = b * c
    itemsize = x1.dtype.itemsize
    # Native dtype, free contiguous reshape; upcast happens inside the kernel.
    x1f = x1.reshape(bc, hw)
    x2f = x2.reshape(bc, hw)

    # Per-generation budgets: v5e/v6e have 128 MiB physical VMEM, v7x 64 MiB.
    vmem_cap = _vmem_capacity_bytes()
    if vmem_cap >= 128 * 1024 * 1024:
        in_budget, vmem_limit = 24 << 20, 96 << 20
    else:
        in_budget, vmem_limit = 12 << 20, 48 << 20

    # Sublane alignment for the storage dtype (8 for f32, 16 for bf16, ...).
    sub_align = max(8, 32 // itemsize)

    # BC tile: 2 inputs x 2 pipeline buffers inside in_budget, capped.
    rows = in_budget // (4 * hw * itemsize)
    tile_bc = max(sub_align, min(2048, (rows // sub_align) * sub_align))
    tile_bc = min(tile_bc, _round_up(bc, sub_align))
    if bc >= 16:   # at least 2 grid steps so both v7x TensorCores get work
        tile_bc = min(tile_bc, _round_up((bc + 1) // 2, sub_align))

    # Chunk rows: bound live roll temporaries (~10 x chunk x hw x 4B <~ 4 MiB).
    chunk_cap = ((4 << 20) // (40 * hw) // 8) * 8
    chunk_rows = min(128, chunk_cap, tile_bc)
    chunk_rows = max(sub_align, (chunk_rows // sub_align) * sub_align)
    tile_bc = max(chunk_rows, (tile_bc // chunk_rows) * chunk_rows)

    num_steps = -(-bc // tile_bc)          # cdiv; last block may be ragged
    ragged = (bc % tile_bc) != 0

    fold = (hw % 128 == 0) and hw >= 128   # lane-dense (8,128) partial output
    out_w = 128 if fold else hw
    pow2_w = wd > 0 and (wd & (wd - 1)) == 0

    kernel = _make_kernel(wd, hw, float(w), tile_bc, chunk_rows, out_w,
                          bc, ragged, pow2_w)

    in_specs = [
        pl.BlockSpec((tile_bc, hw), lambda i: (i, 0)),   # x1 slab
        pl.BlockSpec((tile_bc, hw), lambda i: (i, 0)),   # x2 slab
    ]
    args = [x1f, x2f]
    if not pow2_w:
        # Column-within-row index per lane (avoids integer % in the kernel).
        colw = (jnp.arange(hw, dtype=jnp.int32) % jnp.int32(wd)).reshape(1, hw)
        in_specs.append(pl.BlockSpec((1, hw), lambda i: (0, 0)))
        args.append(colw)

    grid_spec = pltpu.PrefetchScalarGridSpec(
        num_scalar_prefetch=0,
        grid=(num_steps,),
        in_specs=in_specs,
        out_specs=pl.BlockSpec((None, 8, out_w), lambda i: (i, 0, 0)),
    )

    partials = pl.pallas_call(
        kernel,
        out_shape=jax.ShapeDtypeStruct((num_steps, 8, out_w), jnp.float32),
        grid_spec=grid_spec,
        compiler_params=pltpu.CompilerParams(
            dimension_semantics=("parallel",),   # disjoint partials per step
            vmem_limit_bytes=vmem_limit,
        ),
    )(*args)

    total = jnp.sum(partials)
    if reduction == "mean":
        return total / (b * c * h * wd)
    return total


def _gw_loss_ref(x1, x2, w=GW_W, reduction="mean"):
    """Pure-JAX reference mirroring the PyTorch module (NCHW depthwise conv)."""
    b, c, h, wd = x1.shape
    sobel_x = jnp.array([[-1, 0, 1], [-2, 0, 2], [-1, 0, 1]], jnp.float32)
    sobel_y = jnp.array([[-1, -2, -1], [0, 0, 0], [1, 2, 1]], jnp.float32)
    wx = jnp.broadcast_to(sobel_x, (c, 1, 3, 3))
    wy = jnp.broadcast_to(sobel_y, (c, 1, 3, 3))

    def dwconv(x, k):
        return jax.lax.conv_general_dilated(
            x.astype(jnp.float32), k, window_strides=(1, 1),
            padding=((1, 1), (1, 1)),
            dimension_numbers=("NCHW", "OIHW", "NCHW"),
            feature_group_count=c)

    ix1, ix2 = dwconv(x1, wx), dwconv(x2, wx)
    iy1, iy2 = dwconv(x1, wy), dwconv(x2, wy)
    dx = jnp.abs(ix1 - ix2)
    dy = jnp.abs(iy1 - iy2)
    loss = (1.0 + w * dx) * (1.0 + w * dy) * jnp.abs(
        x1.astype(jnp.float32) - x2.astype(jnp.float32))
    return jnp.mean(loss) if reduction == "mean" else jnp.sum(loss)


if __name__ == "__main__":
    key = jax.random.PRNGKey(0)
    k1, k2 = jax.random.split(key)
    B, C, H, W = 2, 4, 16, 16
    x1 = jax.random.normal(k1, (B, C, H, W), dtype=jnp.float32)
    x2 = jax.random.normal(k2, (B, C, H, W), dtype=jnp.float32)

    out = jax.block_until_ready(gw_loss(x1, x2, reduction="mean"))
    ref = jax.block_until_ready(_gw_loss_ref(x1, x2, reduction="mean"))
    assert jnp.allclose(out, ref, rtol=1e-5, atol=1e-5), (out, ref)

    print("KERNEL_OK")
</pallas_src>

<mosaic_0001>
module attributes {stable_mosaic.version = 11 : i64} {
  func.func @kernel(%arg0: i32, %arg1: memref<8x256xf32, #tpu.memory_space<vmem>>, %arg2: memref<8x256xf32, #tpu.memory_space<vmem>>, %arg3: memref<1x8x128xf32, #tpu.memory_space<vmem>>) attributes {dimension_semantics = [#tpu.dimension_semantics<parallel>], iteration_bounds = array<i64: 1>, scalar_prefetch = 0 : i64, scratch_operands = 0 : i64, tpu.core_type = #tpu.core_type<tc>, window_params = [{transform_indices = @transform_0, window_bounds = array<i64: 8, 256>}, {transform_indices = @transform_1, window_bounds = array<i64: 8, 256>}, {transform_indices = @transform_2, window_bounds = array<i64: 1, 8, 128>}]} {
    %0 = tpu.iota {dimensions = array<i32: 1>} : vector<1x256xi32>
    %c15_i32 = arith.constant 15 : i32
    %1 = vector.broadcast %c15_i32 : i32 to vector<1x256xi32>
    %2 = arith.andi %0, %1 : vector<1x256xi32>
    %c15_i32_0 = arith.constant 15 : i32
    %3 = vector.broadcast %c15_i32_0 : i32 to vector<1x256xi32>
    %4 = arith.cmpi ne, %2, %3 : vector<1x256xi32>
    %5 = vector.shape_cast %4 : vector<1x256xi1> to vector<1x256xi1>
    %6 = vector.broadcast %5 : vector<1x256xi1> to vector<8x256xi1>
    %c0_i32 = arith.constant 0 : i32
    %7 = vector.broadcast %c0_i32 : i32 to vector<1x256xi32>
    %8 = arith.cmpi ne, %2, %7 : vector<1x256xi32>
    %9 = vector.shape_cast %8 : vector<1x256xi1> to vector<1x256xi1>
    %10 = vector.broadcast %9 : vector<1x256xi1> to vector<8x256xi1>
    %c16_i32 = arith.constant 16 : i32
    %11 = vector.broadcast %c16_i32 : i32 to vector<1x256xi32>
    %12 = arith.cmpi sge, %0, %11 : vector<1x256xi32>
    %13 = vector.shape_cast %12 : vector<1x256xi1> to vector<1x256xi1>
    %14 = vector.broadcast %13 : vector<1x256xi1> to vector<8x256xi1>
    %c240_i32 = arith.constant 240 : i32
    %15 = vector.broadcast %c240_i32 : i32 to vector<1x256xi32>
    %16 = arith.cmpi slt, %0, %15 : vector<1x256xi32>
    %17 = vector.shape_cast %16 : vector<1x256xi1> to vector<1x256xi1>
    %18 = vector.broadcast %17 : vector<1x256xi1> to vector<8x256xi1>
    %c0 = arith.constant 0 : index
    %c0_1 = arith.constant 0 : index
    %19 = vector.load %arg1[%c0, %c0_1] : memref<8x256xf32, #tpu.memory_space<vmem>>, vector<8x256xf32>
    %c0_2 = arith.constant 0 : index
    %c0_3 = arith.constant 0 : index
    %20 = vector.load %arg2[%c0_2, %c0_3] : memref<8x256xf32, #tpu.memory_space<vmem>>, vector<8x256xf32>
    %21 = arith.subf %19, %20 : vector<8x256xf32>
    %c255_i32 = arith.constant 255 : i32
    %22 = tpu.dynamic_rotate %21 by %c255_i32 dim 1 : vector<8x256xf32>, i32 -> vector<8x256xf32>
    %cst = arith.constant 0.000000e+00 : f32
    %23 = vector.broadcast %cst : f32 to vector<8x256xf32>
    %24 = arith.select %6, %22, %23 : vector<8x256xi1>, vector<8x256xf32>
    %c1_i32 = arith.constant 1 : i32
    %25 = tpu.dynamic_rotate %21 by %c1_i32 dim 1 : vector<8x256xf32>, i32 -> vector<8x256xf32>
    %cst_4 = arith.constant 0.000000e+00 : f32
    %26 = vector.broadcast %cst_4 : f32 to vector<8x256xf32>
    %27 = arith.select %10, %25, %26 : vector<8x256xi1>, vector<8x256xf32>
    %cst_5 = arith.constant 2.000000e+00 : f32
    %28 = vector.broadcast %cst_5 : f32 to vector<8x256xf32>
    %29 = arith.mulf %28, %21 : vector<8x256xf32>
    %30 = arith.addf %27, %29 : vector<8x256xf32>
    %31 = arith.addf %30, %24 : vector<8x256xf32>
    %32 = arith.subf %24, %27 : vector<8x256xf32>
    %c16_i32_6 = arith.constant 16 : i32
    %33 = tpu.dynamic_rotate %32 by %c16_i32_6 dim 1 : vector<8x256xf32>, i32 -> vector<8x256xf32>
    %cst_7 = arith.constant 0.000000e+00 : f32
    %34 = vector.broadcast %cst_7 : f32 to vector<8x256xf32>
    %35 = arith.select %14, %33, %34 : vector<8x256xi1>, vector<8x256xf32>
    %c240_i32_8 = arith.constant 240 : i32
    %36 = tpu.dynamic_rotate %32 by %c240_i32_8 dim 1 : vector<8x256xf32>, i32 -> vector<8x256xf32>
    %cst_9 = arith.constant 0.000000e+00 : f32
    %37 = vector.broadcast %cst_9 : f32 to vector<8x256xf32>
    %38 = arith.select %18, %36, %37 : vector<8x256xi1>, vector<8x256xf32>
    %c16_i32_10 = arith.constant 16 : i32
    %39 = tpu.dynamic_rotate %31 by %c16_i32_10 dim 1 : vector<8x256xf32>, i32 -> vector<8x256xf32>
    %cst_11 = arith.constant 0.000000e+00 : f32
    %40 = vector.broadcast %cst_11 : f32 to vector<8x256xf32>
    %41 = arith.select %14, %39, %40 : vector<8x256xi1>, vector<8x256xf32>
    %c240_i32_12 = arith.constant 240 : i32
    %42 = tpu.dynamic_rotate %31 by %c240_i32_12 dim 1 : vector<8x256xf32>, i32 -> vector<8x256xf32>
    %cst_13 = arith.constant 0.000000e+00 : f32
    %43 = vector.broadcast %cst_13 : f32 to vector<8x256xf32>
    %44 = arith.select %18, %42, %43 : vector<8x256xi1>, vector<8x256xf32>
    %cst_14 = arith.constant 2.000000e+00 : f32
    %45 = vector.broadcast %cst_14 : f32 to vector<8x256xf32>
    %46 = arith.mulf %45, %32 : vector<8x256xf32>
    %47 = arith.addf %35, %46 : vector<8x256xf32>
    %48 = arith.addf %47, %38 : vector<8x256xf32>
    %49 = arith.subf %44, %41 : vector<8x256xf32>
    %50 = math.absf %48 : vector<8x256xf32>
    %cst_15 = arith.constant 4.000000e+00 : f32
    %51 = vector.broadcast %cst_15 : f32 to vector<8x256xf32>
    %52 = arith.mulf %51, %50 : vector<8x256xf32>
    %cst_16 = arith.constant 1.000000e+00 : f32
    %53 = vector.broadcast %cst_16 : f32 to vector<8x256xf32>
    %54 = arith.addf %53, %52 : vector<8x256xf32>
    %55 = math.absf %49 : vector<8x256xf32>
    %cst_17 = arith.constant 4.000000e+00 : f32
    %56 = vector.broadcast %cst_17 : f32 to vector<8x256xf32>
    %57 = arith.mulf %56, %55 : vector<8x256xf32>
    %cst_18 = arith.constant 1.000000e+00 : f32
    %58 = vector.broadcast %cst_18 : f32 to vector<8x256xf32>
    %59 = arith.addf %58, %57 : vector<8x256xf32>
    %60 = arith.mulf %54, %59 : vector<8x256xf32>
    %61 = math.absf %21 : vector<8x256xf32>
    %62 = arith.mulf %60, %61 : vector<8x256xf32>
    %63 = vector.extract_strided_slice %62 {offsets = [0, 0], sizes = [8, 128], strides = [1, 1]} : vector<8x256xf32> to vector<8x128xf32>
    %64 = vector.extract_strided_slice %62 {offsets = [0, 128], sizes = [8, 128], strides = [1, 1]} : vector<8x256xf32> to vector<8x128xf32>
    %65 = arith.addf %63, %64 : vector<8x128xf32>
    %c0_19 = arith.constant 0 : index
    %c0_20 = arith.constant 0 : index
    %c0_21 = arith.constant 0 : index
    %66 = vector.load %arg3[%c0_19, %c0_20, %c0_21] : memref<1x8x128xf32, #tpu.memory_space<vmem>>, vector<1x8x128xf32>
    %67 = vector.shape_cast %66 : vector<1x8x128xf32> to vector<8x128xf32>
    %68 = vector.shape_cast %65 : vector<8x128xf32> to vector<1x8x128xf32>
    tpu.vector_store %arg3[%c0_19, %c0_20, %c0_21], %68 {strides = array<i32>} : memref<1x8x128xf32, #tpu.memory_space<vmem>>, vector<1x8x128xf32>,
    return
  }
  func.func @transform_0(%arg0: i32) -> (i32, i32) {
    %c0_i32 = arith.constant 0 : i32
    %c0_i32_0 = arith.constant 0 : i32
    return %arg0, %c0_i32 : i32, i32
  }
  func.func @transform_1(%arg0: i32) -> (i32, i32) {
    %c0_i32 = arith.constant 0 : i32
    %c0_i32_0 = arith.constant 0 : i32
    return %arg0, %c0_i32 : i32, i32
  }
  func.func @transform_2(%arg0: i32) -> (i32, i32, i32) {
    %c0_i32 = arith.constant 0 : i32
    %c0_i32_0 = arith.constant 0 : i32
    %c0_i32_1 = arith.constant 0 : i32
    return %arg0, %c0_i32, %c0_i32_0 : i32, i32, i32
  }
}

</mosaic_0001>

<llo_original>
// kernel: tpu_custom_call.1
$region0: #{tpu_custom_call.1}
  #allocation0 [shape = 'u32[]', space=smem, size = 0x4, offset = 0x4, fixed_abs, tag = 'smem constant byte address 0x4 - core index']
  #allocation1 [shape = 'u32[144,128]{1,0:T(1,128)}', space=vmem, size = 0x12000, scoped, tag = 'internal scratch']
  %s0 = inlined_call_operand.hbm [shape: f32[8,256], index: 0, kind: input, shape index: {}]
  %s1 = inlined_call_operand.hbm [shape: f32[8,256], index: 1, kind: input, shape index: {}]
  %s2 = inlined_call_operand.hbm [shape: f32[1,8,128], index: 2, kind: output, shape index: {}]
  %s3 = sld [smem:[#allocation0]]
  $region26: #{tpu_custom_call.1} parent=0
    _
  %s5 = ssub.s32 1, %s3
  %s6 = scalar_select 0, %s5, %s3
  $region1: #{tpu_custom_call.1} parent=0
    #allocation2 [shape = 'u8[8192]{0}', space=vmem, size = 0x2000, scoped, tag = 'input window, operand 0, single buffered']
    #allocation3 [shape = 's32[1]{0}', space=sflag, size = 0x4, scoped, tag = 'scoped memory for tpu_custom_call.1']
    #allocation4 [shape = 's32[1]{0}', space=sflag, size = 0x4, scoped, tag = 'scoped memory for tpu_custom_call.1']
    #allocation5 [shape = 'u8[8192]{0}', space=vmem, size = 0x2000, scoped, tag = 'input window, operand 1, single buffered']
    #allocation6 [shape = 's32[1]{0}', space=sflag, size = 0x4, scoped, tag = 'scoped memory for tpu_custom_call.1']
    #allocation7 [shape = 'u8[4096]{0}', space=vmem, size = 0x1000, scoped, tag = 'output window, operand 0, single buffered']
    %7 = vsyncpa [#allocation3], 0
    %8 = vsyncpa [#allocation6], 0
    %9 = vsyncpa [#allocation4], 0
    // Predicated region
    $region2: #{tpu_custom_call.1} parent=1 // pred_check
      _
    $region3: #{tpu_custom_call.1} parent=1 // pred_check_branch
      %11 = sbr.rel (0) target = $region5
    $region4: #{tpu_custom_call.1} parent=1 // pred_region
      %s13 = ssub.s32 256, 256
      %14 = vsyncadd [#allocation3], %s13
      %s16 = sshll.u32 [#allocation2], 4
      %s17 = int_to_ptr.vmem [resolvable:$true] %s16
      %19 = dma.hbm_to_vmem [thread:$0]  %s0, 256, %s17, [#allocation3]
    $region5: #{tpu_custom_call.1} parent=1 // pred_fallthru
      _
    // Predicated region
    $region6: #{tpu_custom_call.1} parent=1 // pred_check
      _
    $region7: #{tpu_custom_call.1} parent=1 // pred_check_branch
      %21 = sbr.rel (0) target = $region9
    $region8: #{tpu_custom_call.1} parent=1 // pred_region
      %s23 = ssub.s32 256, 256
      %24 = vsyncadd [#allocation6], %s23
      %s26 = sshll.u32 [#allocation5], 4
      %s27 = int_to_ptr.vmem [resolvable:$true] %s26
      %29 = dma.hbm_to_vmem [thread:$0]  %s1, 256, %s27, [#allocation6]
    $region9: #{tpu_custom_call.1} parent=1 // pred_fallthru
      _
    // Predicated region
    $region10: #{tpu_custom_call.1} parent=1 // pred_check
      _
    $region11: #{tpu_custom_call.1} parent=1 // pred_check_branch
      %31 = sbr.rel (0) target = $region13
    $region12: #{tpu_custom_call.1} parent=1 // pred_region
      %32 = dma.done [#allocation3], 256
    $region13: #{tpu_custom_call.1} parent=1 // pred_fallthru
      _
    // Predicated region
    $region14: #{tpu_custom_call.1} parent=1 // pred_check
      _
    $region15: #{tpu_custom_call.1} parent=1 // pred_check_branch
      %34 = sbr.rel (0) target = $region17
    $region16: #{tpu_custom_call.1} parent=1 // pred_region
      %35 = dma.done [#allocation6], 256
    $region17: #{tpu_custom_call.1} parent=1 // pred_fallthru
      _
    %v36 = vlaneseq
    %v37 = vand.u32 %v36, 127
    %v38 = vadd.s32 %v37, 128
    %v39 = vand.u32 %v37, 15
    %v40 = vand.u32 %v38, 15
    %vm41 = vcmp.ne.s32.totalorder %v39, 15
    %vm42 = vcmp.ne.s32.totalorder %v40, 15
    %v43 = vsel %vm41, 1, 0
    %v44 = vsel %vm42, 1, 0
    %vm45 = vcmp.eq.s32.totalorder %v43, 1
    %vm46 = vcmp.eq.s32.totalorder %v44, 1
    %vm47 = vcmp.ne.s32.totalorder %v39, 0
    %vm48 = vcmp.ne.s32.totalorder %v40, 0
    %v49 = vsel %vm47, 1, 0
    %v50 = vsel %vm48, 1, 0
    %vm51 = vcmp.eq.s32.totalorder %v49, 1
    %vm52 = vcmp.eq.s32.totalorder %v50, 1
    %vm53 = vcmp.ge.s32.totalorder %v37, 16
    %vm54 = vcmp.ge.s32.totalorder %v38, 16
    %v55 = vsel %vm53, 1, 0
    %v56 = vsel %vm54, 1, 0
    %vm57 = vcmp.eq.s32.totalorder %v55, 1
    %vm58 = vcmp.eq.s32.totalorder %v56, 1
    %vm59 = vcmp.lt.s32.totalorder %v37, 240
    %vm60 = vcmp.lt.s32.totalorder %v38, 240
    %v61 = vsel %vm59, 1, 0
    %v62 = vsel %vm60, 1, 0
    %vm63 = vcmp.eq.s32.totalorder %v61, 1
    %vm64 = vcmp.eq.s32.totalorder %v62, 1
    %v65 = vld [vmem:[#allocation2] sm:$0xff]
    %v66 = vld [vmem:[#allocation2 + $0x8] sm:$0xff]
    %v67 = vld [vmem:[#allocation5] sm:$0xff]
    %v68 = vld [vmem:[#allocation5 + $0x8] sm:$0xff]
    %v69 = vsub.f32 %v65, %v67
    %v70 = vsub.f32 %v66, %v68
    %71 = vrot.lane.b32.xlu0 %v69, 127
    %v72 = vpop.permute.xlu0 %71
    %73 = vrot.lane.b32.xlu0 %v70, 127
    %v74 = vpop.permute.xlu0 %73
    %vm75 = vcmp.lt.s32.totalorder %v37, 127
    %v76 = vsel %vm75, %v72, %v74
    %v77 = vsel %vm75, %v74, %v72
    %v78 = vsel %vm45, %v76, 0.0
    %v79 = vsel %vm46, %v77, 0.0
    %80 = vrot.lane.b32.xlu0 %v69, 1
    %v81 = vpop.permute.xlu0 %80
    %82 = vrot.lane.b32.xlu0 %v70, 1
    %v83 = vpop.permute.xlu0 %82
    %vm84 = vcmp.lt.s32.totalorder %v37, 1
    %v85 = vsel %vm84, %v81, %v83
    %v86 = vsel %vm84, %v83, %v81
    %v87 = vsel %vm51, %v86, 0.0
    %v88 = vsel %vm52, %v85, 0.0
    %v89 = vmul.f32 %v69, 2.0
    %v90 = vmul.f32 %v70, 2.0
    %v91 = vadd.f32 %v87, %v89
    %v92 = vadd.f32 %v88, %v90
    %v93 = vadd.f32 %v91, %v78
    %v94 = vadd.f32 %v92, %v79
    %v95 = vsub.f32 %v78, %v87
    %v96 = vsub.f32 %v79, %v88
    %97 = vrot.lane.b32.xlu0 %v95, 16
    %v98 = vpop.permute.xlu0 %97
    %99 = vrot.lane.b32.xlu0 %v96, 16
    %v100 = vpop.permute.xlu0 %99
    %vm101 = vcmp.lt.s32.totalorder %v37, 16
    %v102 = vsel %vm101, %v98, %v100
    %v103 = vsel %vm101, %v100, %v98
    %v104 = vsel %vm57, %v103, 0.0
    %v105 = vsel %vm58, %v102, 0.0
    %106 = vrot.lane.b32.xlu0 %v95, 112
    %v107 = vpop.permute.xlu0 %106
    %108 = vrot.lane.b32.xlu0 %v96, 112
    %v109 = vpop.permute.xlu0 %108
    %vm110 = vcmp.lt.s32.totalorder %v37, 112
    %v111 = vsel %vm110, %v107, %v109
    %v112 = vsel %vm110, %v109, %v107
    %v113 = vsel %vm63, %v111, 0.0
    %v114 = vsel %vm64, %v112, 0.0
    %115 = vrot.lane.b32.xlu0 %v93, 16
    %v116 = vpop.permute.xlu0 %115
    %117 = vrot.lane.b32.xlu0 %v94, 16
    %v118 = vpop.permute.xlu0 %117
    %v119 = vsel %vm101, %v116, %v118
    %v120 = vsel %vm101, %v118, %v116
    %v121 = vsel %vm57, %v120, 0.0
    %v122 = vsel %vm58, %v119, 0.0
    %123 = vrot.lane.b32.xlu0 %v93, 112
    %v124 = vpop.permute.xlu0 %123
    %125 = vrot.lane.b32.xlu0 %v94, 112
    %v126 = vpop.permute.xlu0 %125
    %v127 = vsel %vm110, %v124, %v126
    %v128 = vsel %vm110, %v126, %v124
    %v129 = vsel %vm63, %v127, 0.0
    %v130 = vsel %vm64, %v128, 0.0
    %v131 = vmul.f32 %v95, 2.0
    %v132 = vmul.f32 %v96, 2.0
    %v133 = vadd.f32 %v104, %v131
    %v134 = vadd.f32 %v105, %v132
    %v135 = vadd.f32 %v133, %v113
    %v136 = vadd.f32 %v134, %v114
    %v137 = vsub.f32 %v129, %v121
    %v138 = vsub.f32 %v130, %v122
    %v139 = vand.u32 2147483647, %v135
    %v140 = vand.u32 2147483647, %v136
    %v141 = vmul.f32 %v139, 4.0
    %v142 = vmul.f32 %v140, 4.0
    %v143 = vadd.f32 %v141, 1.0
    %v144 = vadd.f32 %v142, 1.0
    %v145 = vand.u32 2147483647, %v137
    %v146 = vand.u32 2147483647, %v138
    %v147 = vmul.f32 %v145, 4.0
    %v148 = vmul.f32 %v146, 4.0
    %v149 = vadd.f32 %v147, 1.0
    %v150 = vadd.f32 %v148, 1.0
    %v151 = vmul.f32 %v143, %v149
    %v152 = vmul.f32 %v144, %v150
    %v153 = vand.u32 2147483647, %v69
    %v154 = vand.u32 2147483647, %v70
    %v155 = vmul.f32 %v151, %v153
    %v156 = vmul.f32 %v152, %v154
    %v157 = vadd.f32 %v155, %v156
    %158 = vst [vmem:[#allocation7] sm:$0xff] %v157
    // Predicated region
    $region18: #{tpu_custom_call.1} parent=1 // pred_check
      _
    $region19: #{tpu_custom_call.1} parent=1 // pred_check_branch
      %160 = sbr.rel (0) target = $region21
    $region20: #{tpu_custom_call.1} parent=1 // pred_region
      %s162 = ssub.s32 128, 128
      %163 = vsyncadd [#allocation4], %s162
      %s165 = sshll.u32 [#allocation7], 4
      %s166 = int_to_ptr.vmem [resolvable:$true] %s165
      %168 = dma.vmem_to_hbm [thread:$0]  %s166, 128, %s2, [#allocation4]
    $region21: #{tpu_custom_call.1} parent=1 // pred_fallthru
      _
    // Predicated region
    $region22: #{tpu_custom_call.1} parent=1 // pred_check
      _
    $region23: #{tpu_custom_call.1} parent=1 // pred_check_branch
      %170 = sbr.rel (0) target = $region25
    $region24: #{tpu_custom_call.1} parent=1 // pred_region
      %171 = dma.done [#allocation4], 128
    $region25: #{tpu_custom_call.1} parent=1 // pred_fallthru
      _
    %172 = vsyncpa [#allocation3], 1
    %173 = vsyncpa [#allocation6], 1
    %174 = vsyncpa [#allocation4], 1

</llo_original>
